<compile_context>
chip_gen: v6e
topology: v6e:2x2x1
jax: 0.10.0
libtpu: 0.0.40
codegen_flags: <defaults>
</compile_context>

<pallas_src>
import functools

import jax
import jax.numpy as jnp
from jax.experimental import pallas as pl
from jax.experimental.pallas import tpu as pltpu


def _round_up(n, m):
    return ((n + m - 1) // m) * m


def _sac_policy_kernel(action_dim, log_std_min, log_std_max,
                       xt_ref, w1t_ref, w2t_ref, wht_ref,
                       b1_ref, b2_ref, bh_ref, o_ref):
    # layer 1 (transposed): [128, S] @ [S, tb] -> f32, +bias column, ReLU
    h1_t = jnp.dot(w1t_ref[...], xt_ref[...],
                   preferred_element_type=jnp.float32)           # [128, tb]
    h1_t = jnp.maximum(h1_t + b1_ref[...], 0.0)

    # layer 2 (transposed): [64, 128] @ [128, tb]
    h2_t = jnp.dot(w2t_ref[...], h1_t.astype(jnp.bfloat16),
                   preferred_element_type=jnp.float32)           # [64, tb]
    h2_t = jnp.maximum(h2_t + b2_ref[...], 0.0)

    # fused heads (transposed): [2*AD, 64] @ [64, tb]  -> lane-dense output
    z_t = jnp.dot(wht_ref[...], h2_t.astype(jnp.bfloat16),
                  preferred_element_type=jnp.float32)            # [2*AD, tb]
    z_t = z_t + bh_ref[...]                                      # [2*AD,1] bcast

    row = jax.lax.broadcasted_iota(jnp.int32, z_t.shape, 0)
    out = jnp.where(row < action_dim,
                    jnp.tanh(z_t),                               # mean rows
                    jnp.clip(z_t, log_std_min, log_std_max))     # log_std rows
    o_ref[...] = out.astype(o_ref.dtype)


def prepare_params(params):
    """One-time packing of the PyTorch-style parameters into kernel operands.

    Params are static across rollout steps, so none of this packing (zero-pad,
    transpose, bf16 cast) is re-emitted per forward call.
    Returned dict contains only arrays (jit-friendly); all config (state_dim,
    action_dim) is recovered from the array shapes inside the forward.
    """
    w1, b1 = params["w1"], params["b1"]          # [S,128], [128]
    w2, b2 = params["w2"], params["b2"]          # [128,64], [64]
    wm, bm = params["wm"], params["bm"]          # [32,AD], [AD]
    ws, bs = params["ws"], params["bs"]          # [32,AD], [AD]
    H1, H2, AD = w1.shape[1], w2.shape[1], wm.shape[1]
    assert H1 == 128 and H2 == 64 and wm.shape[0] == 32 and ws.shape[0] == 32

    # fused, zero-padded head weight, pre-transposed: [2*AD, 64]
    wh = jnp.zeros((H2, 2 * AD), jnp.float32)
    wh = wh.at[:32, :AD].set(wm).at[32:, AD:].set(ws)

    return dict(
        w1t=jnp.asarray(w1, jnp.float32).T.astype(jnp.bfloat16),   # [128, S]
        w2t=jnp.asarray(w2, jnp.float32).T.astype(jnp.bfloat16),   # [64, 128]
        wht=wh.T.astype(jnp.bfloat16),                             # [2*AD, 64]
        b1c=jnp.asarray(b1, jnp.float32).reshape(H1, 1),
        b2c=jnp.asarray(b2, jnp.float32).reshape(H2, 1),
        bhc=jnp.concatenate([bm, bs]).reshape(2 * AD, 1).astype(jnp.float32),
    )


def sac_policy_forward(states, prep, *, tile_b=None,
                       log_std_min=-20.0, log_std_max=2.0):
    """states: [B, state_dim] f32.  prep: output of prepare_params().
    Returns (mean, log_std), each [B, action_dim]."""
    x = jnp.asarray(states, jnp.float32)
    B, S = x.shape
    w1t, w2t, wht = prep["w1t"], prep["w2t"], prep["wht"]
    b1c, b2c, bhc = prep["b1c"], prep["b2c"], prep["bhc"]
    H1, H2 = w1t.shape[0], w2t.shape[0]
    AD = wht.shape[0] // 2
    assert w1t.shape[1] == S

    # --- batch tiling: big tiles (amortize per-step overhead) but always >= 2
    # grid steps once B >= 256 so the "parallel" axis can shard across v7x's
    # two TensorCores.  128-aligned whenever the grid has more than one step
    # so the lane-dense blocks keep a 128-divisible lane width.
    if tile_b is None:
        tile_b = min(2048, _round_up(B, 128))
        if B >= 256:
            tile_b = min(tile_b, _round_up(pl.cdiv(_round_up(B, 128), 2), 128))
    tile_b = max(8, _round_up(int(tile_b), 8))
    if tile_b < B:
        tile_b = _round_up(tile_b, 128)
    Bp = _round_up(B, tile_b)

    # --- activations: one transpose + bf16 cast (batch -> lanes), pad lanes.
    x_t = x.T.astype(jnp.bfloat16)                     # [S, B]
    if Bp != B:
        x_t = jnp.pad(x_t, ((0, 0), (0, Bp - B)))

    grid = (Bp // tile_b,)
    kernel = functools.partial(_sac_policy_kernel, AD,
                               float(log_std_min), float(log_std_max))

    cost = pl.CostEstimate(
        flops=2 * Bp * (S * H1 + H1 * H2 + H2 * 2 * AD),
        transcendentals=Bp * 2 * AD,     # tanh evaluated on all 2*AD rows
        bytes_accessed=(Bp * S * 2 + Bp * 2 * AD * 4
                        + (S * H1 + H1 * H2 + 2 * AD * H2) * 2
                        + (H1 + H2 + 2 * AD) * 4),
    )

    def full_spec(arr):
        return pl.BlockSpec(arr.shape, lambda i: (0,) * arr.ndim)

    out_t = pl.pallas_call(
        kernel,
        out_shape=jax.ShapeDtypeStruct((2 * AD, Bp), jnp.float32),
        grid_spec=pltpu.PrefetchScalarGridSpec(
            num_scalar_prefetch=0,
            grid=grid,
            in_specs=[
                pl.BlockSpec((S, tile_b), lambda i: (0, i)),      # x tile (pipelined)
                full_spec(w1t), full_spec(w2t), full_spec(wht),   # weights (resident)
                full_spec(b1c), full_spec(b2c), full_spec(bhc),   # bias columns
            ],
            out_specs=pl.BlockSpec((2 * AD, tile_b), lambda i: (0, i)),
        ),
        compiler_params=pltpu.CompilerParams(
            dimension_semantics=("parallel",),   # megacore-shard the batch axis
        ),
        cost_estimate=cost,
    )(x_t, w1t, w2t, wht, b1c, b2c, bhc)

    # single host-side transpose; slices fuse under jit.
    out = out_t[:, :B].T                    # [B, 2*AD]
    mean = out[:, :AD]
    log_std = out[:, AD:]
    return mean, log_std


def init_params(key, state_dim, action_dim):
    """Synthetic init matching the nn.Linear shapes; weights stored [in, out]
    so the math is x @ W (== PyTorch x @ W.T with W [out, in])."""
    ks = jax.random.split(key, 8)

    def lin(kw, kb, fan_in, fan_out):
        bound = 1.0 / jnp.sqrt(jnp.float32(fan_in))
        w = jax.random.uniform(kw, (fan_in, fan_out), jnp.float32, -bound, bound)
        b = jax.random.uniform(kb, (fan_out,), jnp.float32, -bound, bound)
        return w, b

    w1, b1 = lin(ks[0], ks[1], state_dim, 128)
    w2, b2 = lin(ks[2], ks[3], 128, 64)
    wm, bm = lin(ks[4], ks[5], 32, action_dim)
    ws, bs = lin(ks[6], ks[7], 32, action_dim)
    return dict(w1=w1, b1=b1, w2=w2, b2=b2, wm=wm, bm=bm, ws=ws, bs=bs)


def _reference(x, p, log_std_min=-20.0, log_std_max=2.0):
    # mirrors the kernel's bf16-input / f32-accumulate numerics
    h1 = jnp.dot(x.astype(jnp.bfloat16), p["w1"].astype(jnp.bfloat16),
                 preferred_element_type=jnp.float32) + p["b1"]
    h1 = jnp.maximum(h1, 0.0)
    h2 = jnp.dot(h1.astype(jnp.bfloat16), p["w2"].astype(jnp.bfloat16),
                 preferred_element_type=jnp.float32) + p["b2"]
    h2 = jnp.maximum(h2, 0.0)
    zm = jnp.dot(h2[:, :32].astype(jnp.bfloat16), p["wm"].astype(jnp.bfloat16),
                 preferred_element_type=jnp.float32) + p["bm"]
    zs = jnp.dot(h2[:, 32:64].astype(jnp.bfloat16), p["ws"].astype(jnp.bfloat16),
                 preferred_element_type=jnp.float32) + p["bs"]
    return jnp.tanh(zm), jnp.clip(zs, log_std_min, log_std_max)


if __name__ == "__main__":
    key = jax.random.PRNGKey(0)
    kx, kp = jax.random.split(key)

    batch, state_dim, action_dim = 256, 16, 4
    x = jax.random.normal(kx, (batch, state_dim), jnp.float32)
    params = init_params(kp, state_dim, action_dim)

    # one-time parameter packing (hoisted out of the per-step forward)
    prep = prepare_params(params)

    # tile_b=128 -> grid=(2,): pipelined x stream, shardable across v7x's 2 TCs
    fwd = jax.jit(functools.partial(sac_policy_forward, tile_b=128))
    mean, log_std = fwd(x, prep)
    mean = jax.block_until_ready(mean)
    log_std = jax.block_until_ready(log_std)

    ref_mean, ref_log_std = _reference(x, params)
    assert mean.shape == (batch, action_dim)
    assert log_std.shape == (batch, action_dim)
    assert jnp.allclose(mean, ref_mean, atol=2e-3, rtol=2e-3), "mean mismatch"
    assert jnp.allclose(log_std, ref_log_std, atol=2e-3, rtol=2e-3), "log_std mismatch"

    # also exercise the default (auto tile_b) path once
    mean2, log_std2 = jax.jit(sac_policy_forward)(x, prep)
    jax.block_until_ready(mean2)
    assert jnp.allclose(mean2, ref_mean, atol=2e-3, rtol=2e-3)
    assert jnp.allclose(log_std2, ref_log_std, atol=2e-3, rtol=2e-3)

    # TODO(synk): get_action/evaluate sampling (MultivariateNormal rsample/log_prob)
    # is stochastic host-side logic outside forward(); not implemented in-kernel.
    print("KERNEL_OK")
</pallas_src>

<mosaic_0001>
module attributes {stable_mosaic.version = 11 : i64} {
  func.func @_sac_policy_kernel(%arg0: i32, %arg1: memref<16x128xbf16, #tpu.memory_space<vmem>>, %arg2: memref<128x16xbf16, #tpu.memory_space<vmem>>, %arg3: memref<64x128xbf16, #tpu.memory_space<vmem>>, %arg4: memref<8x64xbf16, #tpu.memory_space<vmem>>, %arg5: memref<128x1xf32, #tpu.memory_space<vmem>>, %arg6: memref<64x1xf32, #tpu.memory_space<vmem>>, %arg7: memref<8x1xf32, #tpu.memory_space<vmem>>, %arg8: memref<8x128xf32, #tpu.memory_space<vmem>>) attributes {dimension_semantics = [#tpu.dimension_semantics<parallel>], iteration_bounds = array<i64: 2>, scalar_prefetch = 0 : i64, scratch_operands = 0 : i64, tpu.core_type = #tpu.core_type<tc>, window_params = [{transform_indices = @transform_0, window_bounds = array<i64: 16, 128>}, {pipeline_mode = #tpu.pipeline_mode<synchronous>, transform_indices = @transform_1, window_bounds = array<i64: 128, 16>}, {pipeline_mode = #tpu.pipeline_mode<synchronous>, transform_indices = @transform_2, window_bounds = array<i64: 64, 128>}, {pipeline_mode = #tpu.pipeline_mode<synchronous>, transform_indices = @transform_3, window_bounds = array<i64: 8, 64>}, {pipeline_mode = #tpu.pipeline_mode<synchronous>, transform_indices = @transform_4, window_bounds = array<i64: 128, 1>}, {pipeline_mode = #tpu.pipeline_mode<synchronous>, transform_indices = @transform_5, window_bounds = array<i64: 64, 1>}, {pipeline_mode = #tpu.pipeline_mode<synchronous>, transform_indices = @transform_6, window_bounds = array<i64: 8, 1>}, {transform_indices = @transform_7, window_bounds = array<i64: 8, 128>}]} {
    %c0 = arith.constant 0 : index
    %c0_0 = arith.constant 0 : index
    %0 = vector.load %arg2[%c0, %c0_0] : memref<128x16xbf16, #tpu.memory_space<vmem>>, vector<128x16xbf16>
    %c0_1 = arith.constant 0 : index
    %c0_2 = arith.constant 0 : index
    %1 = vector.load %arg1[%c0_1, %c0_2] : memref<16x128xbf16, #tpu.memory_space<vmem>>, vector<16x128xbf16>
    %cst = arith.constant dense<0.000000e+00> : vector<128x128xf32>
    %2 = tpu.matmul %0, %1, %cst {dimension_numbers = #tpu.dot_dimension_numbers<[1], [0], [0], [1], [0, 0, 1, 1], [], []>} : vector<128x16xbf16>, vector<16x128xbf16>, vector<128x128xf32> -> vector<128x128xf32>
    %c0_3 = arith.constant 0 : index
    %c0_4 = arith.constant 0 : index
    %3 = vector.load %arg5[%c0_3, %c0_4] : memref<128x1xf32, #tpu.memory_space<vmem>>, vector<128x1xf32>
    %4 = vector.broadcast %3 : vector<128x1xf32> to vector<128x128xf32>
    %5 = arith.addf %2, %4 : vector<128x128xf32>
    %cst_5 = arith.constant 0.000000e+00 : f32
    %6 = vector.broadcast %cst_5 : f32 to vector<128x128xf32>
    %7 = arith.maximumf %5, %6 : vector<128x128xf32>
    %c0_6 = arith.constant 0 : index
    %c0_7 = arith.constant 0 : index
    %8 = vector.load %arg3[%c0_6, %c0_7] : memref<64x128xbf16, #tpu.memory_space<vmem>>, vector<64x128xbf16>
    %9 = arith.truncf %7 : vector<128x128xf32> to vector<128x128xbf16>
    %cst_8 = arith.constant dense<0.000000e+00> : vector<64x128xf32>
    %10 = tpu.matmul %8, %9, %cst_8 {dimension_numbers = #tpu.dot_dimension_numbers<[1], [0], [0], [1], [0, 0, 1, 1], [], []>} : vector<64x128xbf16>, vector<128x128xbf16>, vector<64x128xf32> -> vector<64x128xf32>
    %c0_9 = arith.constant 0 : index
    %c0_10 = arith.constant 0 : index
    %11 = vector.load %arg6[%c0_9, %c0_10] : memref<64x1xf32, #tpu.memory_space<vmem>>, vector<64x1xf32>
    %12 = vector.broadcast %11 : vector<64x1xf32> to vector<64x128xf32>
    %13 = arith.addf %10, %12 : vector<64x128xf32>
    %cst_11 = arith.constant 0.000000e+00 : f32
    %14 = vector.broadcast %cst_11 : f32 to vector<64x128xf32>
    %15 = arith.maximumf %13, %14 : vector<64x128xf32>
    %c0_12 = arith.constant 0 : index
    %c0_13 = arith.constant 0 : index
    %16 = vector.load %arg4[%c0_12, %c0_13] : memref<8x64xbf16, #tpu.memory_space<vmem>>, vector<8x64xbf16>
    %17 = arith.truncf %15 : vector<64x128xf32> to vector<64x128xbf16>
    %cst_14 = arith.constant dense<0.000000e+00> : vector<8x128xf32>
    %18 = tpu.matmul %16, %17, %cst_14 {dimension_numbers = #tpu.dot_dimension_numbers<[1], [0], [0], [1], [0, 0, 1, 1], [], []>} : vector<8x64xbf16>, vector<64x128xbf16>, vector<8x128xf32> -> vector<8x128xf32>
    %c0_15 = arith.constant 0 : index
    %c0_16 = arith.constant 0 : index
    %19 = vector.load %arg7[%c0_15, %c0_16] : memref<8x1xf32, #tpu.memory_space<vmem>>, vector<8x1xf32>
    %20 = vector.broadcast %19 : vector<8x1xf32> to vector<8x128xf32>
    %21 = arith.addf %18, %20 : vector<8x128xf32>
    %22 = tpu.iota {dimensions = array<i32: 0>} : vector<8x128xi32>
    %c4_i32 = arith.constant 4 : i32
    %23 = vector.broadcast %c4_i32 : i32 to vector<8x128xi32>
    %24 = arith.cmpi slt, %22, %23 : vector<8x128xi32>
    %25 = math.tanh %21 : vector<8x128xf32>
    %cst_17 = arith.constant -2.000000e+01 : f32
    %cst_18 = arith.constant 2.000000e+00 : f32
    %26 = vector.broadcast %cst_17 : f32 to vector<8x128xf32>
    %27 = arith.maximumf %26, %21 : vector<8x128xf32>
    %28 = vector.broadcast %cst_18 : f32 to vector<8x128xf32>
    %29 = arith.minimumf %28, %27 : vector<8x128xf32>
    %30 = arith.select %24, %25, %29 : vector<8x128xi1>, vector<8x128xf32>
    %c0_19 = arith.constant 0 : index
    %c0_20 = arith.constant 0 : index
    %31 = vector.load %arg8[%c0_19, %c0_20] : memref<8x128xf32, #tpu.memory_space<vmem>>, vector<8x128xf32>
    tpu.vector_store %arg8[%c0_19, %c0_20], %30 {strides = array<i32>} : memref<8x128xf32, #tpu.memory_space<vmem>>, vector<8x128xf32>,
    return
  }
  func.func @transform_0(%arg0: i32) -> (i32, i32) {
    %c0_i32 = arith.constant 0 : i32
    %c0_i32_0 = arith.constant 0 : i32
    return %c0_i32, %arg0 : i32, i32
  }
  func.func @transform_1(%arg0: i32) -> (i32, i32) {
    %c0_i32 = arith.constant 0 : i32
    %c0_i32_0 = arith.constant 0 : i32
    %c0_i32_1 = arith.constant 0 : i32
    return %c0_i32, %c0_i32_0 : i32, i32
  }
  func.func @transform_2(%arg0: i32) -> (i32, i32) {
    %c0_i32 = arith.constant 0 : i32
    %c0_i32_0 = arith.constant 0 : i32
    %c0_i32_1 = arith.constant 0 : i32
    return %c0_i32, %c0_i32_0 : i32, i32
  }
  func.func @transform_3(%arg0: i32) -> (i32, i32) {
    %c0_i32 = arith.constant 0 : i32
    %c0_i32_0 = arith.constant 0 : i32
    %c0_i32_1 = arith.constant 0 : i32
    return %c0_i32, %c0_i32_0 : i32, i32
  }
  func.func @transform_4(%arg0: i32) -> (i32, i32) {
    %c0_i32 = arith.constant 0 : i32
    %c0_i32_0 = arith.constant 0 : i32
    %c0_i32_1 = arith.constant 0 : i32
    return %c0_i32, %c0_i32_0 : i32, i32
  }
  func.func @transform_5(%arg0: i32) -> (i32, i32) {
    %c0_i32 = arith.constant 0 : i32
    %c0_i32_0 = arith.constant 0 : i32
    %c0_i32_1 = arith.constant 0 : i32
    return %c0_i32, %c0_i32_0 : i32, i32
  }
  func.func @transform_6(%arg0: i32) -> (i32, i32) {
    %c0_i32 = arith.constant 0 : i32
    %c0_i32_0 = arith.constant 0 : i32
    %c0_i32_1 = arith.constant 0 : i32
    return %c0_i32, %c0_i32_0 : i32, i32
  }
  func.func @transform_7(%arg0: i32) -> (i32, i32) {
    %c0_i32 = arith.constant 0 : i32
    %c0_i32_0 = arith.constant 0 : i32
    return %c0_i32, %arg0 : i32, i32
  }
}

</mosaic_0001>

<llo_original>
// kernel: sac_policy_forward.1
$region0: #{sac_policy_forward.1}
  #allocation0 [shape = 'u32[]', space=smem, size = 0x4, offset = 0x4, fixed_abs, tag = 'smem constant byte address 0x4 - core index']
  #allocation1 [shape = 'u32[144,128]{1,0:T(1,128)}', space=vmem, size = 0x12000, scoped, tag = 'internal scratch']
  %s0 = inlined_call_operand.vmem [shape: bf16[16,256], index: 0, kind: input, shape index: {}]
  %s1 = inlined_call_operand.vmem [shape: bf16[128,16], index: 1, kind: input, shape index: {}]
  %s2 = inlined_call_operand.vmem [shape: bf16[64,128], index: 2, kind: input, shape index: {}]
  %s3 = inlined_call_operand.vmem [shape: bf16[8,64], index: 3, kind: input, shape index: {}]
  %s4 = inlined_call_operand.vmem [shape: f32[128,1], index: 4, kind: input, shape index: {}]
  %s5 = inlined_call_operand.vmem [shape: f32[64,1], index: 5, kind: input, shape index: {}]
  %s6 = inlined_call_operand.vmem [shape: f32[8,1], index: 6, kind: input, shape index: {}]
  %s7 = inlined_call_operand.vmem [shape: f32[8,256], index: 7, kind: output, shape index: {}]
  %s8 = sld [smem:[#allocation0]]
  $region102: #{sac_policy_forward.1} parent=0
    _
  %s10 = ssub.s32 1, %s8
  %s11 = scalar_select 0, %s10, %s8
  $region1: #{sac_policy_forward.1} parent=0
    #allocation2 [shape = 'u8[8192]{0}', space=vmem, size = 0x2000, scoped, tag = 'input window, operand 0']
    loop: start=0, step=1, limit=4
    $region2: #{sac_policy_forward.1} parent=1 // loop_pre_header
      _
    $region3: #{sac_policy_forward.1} parent=1 // loop_header
      %s13 = sphi 0, %s17
      %p14 = scmp.ge.s32.totalorder %s13, 4
      %s23 = sphi 0, %s25
      %s26 = sphi 0, %s23
      %s27 = sphi 0, %s26
      %s43 = sphi 0, %s27
      %s47 = sphi 0, %s47
      %s49 = sphi 0, %s47
      %s50 = sphi 0, %s49
      %s64 = sphi 0, %s50
      %s68 = sphi 0, %s68
      %s70 = sphi 0, %s68
      %s71 = sphi 0, %s70
      %s85 = sphi 0, %s71
      %s89 = sphi 0, %s89
      %s91 = sphi 0, %s89
      %s92 = sphi 0, %s91
      %s106 = sphi 0, %s92
      %s110 = sphi 0, %s110
      %s112 = sphi 0, %s110
      %s113 = sphi 0, %s112
      %s127 = sphi 0, %s113
      %s131 = sphi 0, %s131
      %s133 = sphi 0, %s131
      %s134 = sphi 0, %s133
      %s148 = sphi 0, %s134
      %s152 = sphi 0, %s152
      %s154 = sphi 0, %s152
      %s155 = sphi 0, %s154
      %s169 = sphi 0, %s155
      %s175 = sphi 0, %s177
      %s178 = sphi 0, %s175
      %s179 = sphi 0, %s178
      %s195 = sphi 0, %s179
    $region4: #{sac_policy_forward.1} parent=1 // loop_header_branch
      %16 = sbr.rel (%p14) target = $region8
    $region5: #{sac_policy_forward.1} parent=1 // loop_body
      %s18 = ssub.s32 %s13, 1
      %s19 = ssub.s32 %s13, 2
      %s20 = sadd.s32 %s13, 1
      %s21 = ssub.s32 %s13, %s20
      %p22 = scmp.eq.s32.totalorder %s21, 0
      %s24 = sadd.s32 %s23, 1
      %s25 = scalar_select %p22, %s23, %s24
      %p28 = pneg %p22
      %p29 = scmp.eq.s32.totalorder %s13, 1
      %p30 = por %p28, %p29
      %p31 = scmp.ne.s32.totalorder %s23, %s26
      %p32 = scmp.eq.s32.totalorder %s13, 0
      %p33 = por %p31, %p32
      %p34 = scmp.ne.s32.totalorder %s23, %s26
      %p35 = scmp.eq.s32.totalorder %s18, 1
      %p36 = por %p34, %p35
      %p37 = scmp.ne.s32.totalorder %s26, %s27
      %p38 = scmp.eq.s32.totalorder %s18, 0
      %p39 = por %p37, %p38
      %p40 = scmp.ne.s32.totalorder %s26, %s27
      %p41 = scmp.eq.s32.totalorder %s19, 1
      %p42 = por %p40, %p41
      %p44 = scmp.ne.s32.totalorder %s27, %s43
      %p45 = scmp.eq.s32.totalorder %s19, 0
      %p46 = por %p44, %p45
      %s48 = sadd.s32 %s47, 1
      %p51 = scmp.eq.s32.totalorder %s13, 1
      %p52 = scmp.ne.s32.totalorder %s47, %s49
      %p53 = scmp.eq.s32.totalorder %s13, 0
      %p54 = por %p52, %p53
      %p55 = scmp.ne.s32.totalorder %s47, %s49
      %p56 = scmp.eq.s32.totalorder %s18, 1
      %p57 = por %p55, %p56
      %p58 = scmp.ne.s32.totalorder %s49, %s50
      %p59 = scmp.eq.s32.totalorder %s18, 0
      %p60 = por %p58, %p59
      %p61 = scmp.ne.s32.totalorder %s49, %s50
      %p62 = scmp.eq.s32.totalorder %s19, 1
      %p63 = por %p61, %p62
      %p65 = scmp.ne.s32.totalorder %s50, %s64
      %p66 = scmp.eq.s32.totalorder %s19, 0
      %p67 = por %p65, %p66
      %s69 = sadd.s32 %s68, 1
      %p72 = scmp.eq.s32.totalorder %s13, 1
      %p73 = scmp.ne.s32.totalorder %s68, %s70
      %p74 = scmp.eq.s32.totalorder %s13, 0
      %p75 = por %p73, %p74
      %p76 = scmp.ne.s32.totalorder %s68, %s70
      %p77 = scmp.eq.s32.totalorder %s18, 1
      %p78 = por %p76, %p77
      %p79 = scmp.ne.s32.totalorder %s70, %s71
      %p80 = scmp.eq.s32.totalorder %s18, 0
      %p81 = por %p79, %p80
      %p82 = scmp.ne.s32.totalorder %s70, %s71
      %p83 = scmp.eq.s32.totalorder %s19, 1
      %p84 = por %p82, %p83
      %p86 = scmp.ne.s32.totalorder %s71, %s85
      %p87 = scmp.eq.s32.totalorder %s19, 0
      %p88 = por %p86, %p87
      %s90 = sadd.s32 %s89, 1
      %p93 = scmp.eq.s32.totalorder %s13, 1
      %p94 = scmp.ne.s32.totalorder %s89, %s91
      %p95 = scmp.eq.s32.totalorder %s13, 0
      %p96 = por %p94, %p95
      %p97 = scmp.ne.s32.totalorder %s89, %s91
      %p98 = scmp.eq.s32.totalorder %s18, 1
      %p99 = por %p97, %p98
      %p100 = scmp.ne.s32.totalorder %s91, %s92
      %p101 = scmp.eq.s32.totalorder %s18, 0
      %p102 = por %p100, %p101
      %p103 = scmp.ne.s32.totalorder %s91, %s92
      %p104 = scmp.eq.s32.totalorder %s19, 1
      %p105 = por %p103, %p104
      %p107 = scmp.ne.s32.totalorder %s92, %s106
      %p108 = scmp.eq.s32.totalorder %s19, 0
      %p109 = por %p107, %p108
      %s111 = sadd.s32 %s110, 1
      %p114 = scmp.eq.s32.totalorder %s13, 1
      %p115 = scmp.ne.s32.totalorder %s110, %s112
      %p116 = scmp.eq.s32.totalorder %s13, 0
      %p117 = por %p115, %p116
      %p118 = scmp.ne.s32.totalorder %s110, %s112
      %p119 = scmp.eq.s32.totalorder %s18, 1
      %p120 = por %p118, %p119
      %p121 = scmp.ne.s32.totalorder %s112, %s113
      %p122 = scmp.eq.s32.totalorder %s18, 0
      %p123 = por %p121, %p122
      %p124 = scmp.ne.s32.totalorder %s112, %s113
      %p125 = scmp.eq.s32.totalorder %s19, 1
      %p126 = por %p124, %p125
      %p128 = scmp.ne.s32.totalorder %s113, %s127
      %p129 = scmp.eq.s32.totalorder %s19, 0
      %p130 = por %p128, %p129
      %s132 = sadd.s32 %s131, 1
      %p135 = scmp.eq.s32.totalorder %s13, 1
      %p136 = scmp.ne.s32.totalorder %s131, %s133
      %p137 = scmp.eq.s32.totalorder %s13, 0
      %p138 = por %p136, %p137
      %p139 = scmp.ne.s32.totalorder %s131, %s133
      %p140 = scmp.eq.s32.totalorder %s18, 1
      %p141 = por %p139, %p140
      %p142 = scmp.ne.s32.totalorder %s133, %s134
      %p143 = scmp.eq.s32.totalorder %s18, 0
      %p144 = por %p142, %p143
      %p145 = scmp.ne.s32.totalorder %s133, %s134
      %p146 = scmp.eq.s32.totalorder %s19, 1
      %p147 = por %p145, %p146
      %p149 = scmp.ne.s32.totalorder %s134, %s148
      %p150 = scmp.eq.s32.totalorder %s19, 0
      %p151 = por %p149, %p150
      %s153 = sadd.s32 %s152, 1
      %p156 = scmp.eq.s32.totalorder %s13, 1
      %p157 = scmp.ne.s32.totalorder %s152, %s154
      %p158 = scmp.eq.s32.totalorder %s13, 0
      %p159 = por %p157, %p158
      %p160 = scmp.ne.s32.totalorder %s152, %s154
      %p161 = scmp.eq.s32.totalorder %s18, 1
      %p162 = por %p160, %p161
      %p163 = scmp.ne.s32.totalorder %s154, %s155
      %p164 = scmp.eq.s32.totalorder %s18, 0
      %p165 = por %p163, %p164
      %p166 = scmp.ne.s32.totalorder %s154, %s155
      %p167 = scmp.eq.s32.totalorder %s19, 1
      %p168 = por %p166, %p167
      %p170 = scmp.ne.s32.totalorder %s155, %s169
      %p171 = scmp.eq.s32.totalorder %s19, 0
      %p172 = por %p170, %p171
      %s173 = ssub.s32 %s13, %s20
      %p174 = scmp.eq.s32.totalorder %s173, 0
      %s176 = sadd.s32 %s175, 1
      %s177 = scalar_select %p174, %s175, %s176
      %p180 = pneg %p174
      %p181 = scmp.eq.s32.totalorder %s13, 1
      %p182 = por %p180, %p181
      %p183 = scmp.ne.s32.totalorder %s175, %s178
      %p184 = scmp.eq.s32.totalorder %s13, 0
      %p185 = por %p183, %p184
      %p186 = scmp.ne.s32.totalorder %s175, %s178
      %p187 = scmp.eq.s32.totalorder %s18, 1
      %p188 = por %p186, %p187
      %p189 = scmp.ne.s32.totalorder %s178, %s179
      %p190 = scmp.eq.s32.totalorder %s18, 0
      %p191 = por %p189, %p190
      %p192 = scmp.ne.s32.totalorder %s178, %s179
      %p193 = scmp.eq.s32.totalorder %s19, 1
      %p194 = por %p192, %p193
      %p196 = scmp.ne.s32.totalorder %s179, %s195
      %p197 = scmp.eq.s32.totalorder %s19, 0
      %p198 = por %p196, %p197
      %p199 = scmp.le.s32.totalorder 1, %s13
      %p200 = scmp.lt.s32.totalorder %s13, 3
      %p201 = pnand %p199, %p200
      %p202 = pneg %p201
      // Predicated region
      $region9: #{sac_policy_forward.1} parent=5 // pred_check
        _
      $region10: #{sac_policy_forward.1} parent=5 // pred_check_branch
        %204 = sbr.rel (%p201) target = $region12
      $region11: #{sac_policy_forward.1} parent=5 // pred_region
        %s205 = ssub.s32 %s13, 1
        // Predicated region
        $region13: #{sac_policy_forward.1} parent=11 // pred_check
          %p206 = pneg %p60
        $region14: #{sac_policy_forward.1} parent=11 // pred_check_branch
          %208 = sbr.rel (%p206) target = $region16
        $region15: #{sac_policy_forward.1} parent=11 // pred_region
          _
        $region16: #{sac_policy_forward.1} parent=11 // pred_fallthru
          _
        // Predicated region
        $region17: #{sac_policy_forward.1} parent=11 // pred_check
          %p209 = pneg %p81
        $region18: #{sac_policy_forward.1} parent=11 // pred_check_branch
          %211 = sbr.rel (%p209) target = $region20
        $region19: #{sac_policy_forward.1} parent=11 // pred_region
          _
        $region20: #{sac_policy_forward.1} parent=11 // pred_fallthru
          _
        // Predicated region
        $region21: #{sac_policy_forward.1} parent=11 // pred_check
          %p212 = pneg %p102
        $region22: #{sac_policy_forward.1} parent=11 // pred_check_branch
          %214 = sbr.rel (%p212) target = $region24
        $region23: #{sac_policy_forward.1} parent=11 // pred_region
          _
        $region24: #{sac_policy_forward.1} parent=11 // pred_fallthru
          _
        // Predicated region
        $region25: #{sac_policy_forward.1} parent=11 // pred_check
          %p215 = pneg %p123
        $region26: #{sac_policy_forward.1} parent=11 // pred_check_branch
          %217 = sbr.rel (%p215) target = $region28
        $region27: #{sac_policy_forward.1} parent=11 // pred_region
          _
        $region28: #{sac_policy_forward.1} parent=11 // pred_fallthru
          _
        // Predicated region
        $region29: #{sac_policy_forward.1} parent=11 // pred_check
          %p218 = pneg %p144
        $region30: #{sac_policy_forward.1} parent=11 // pred_check_branch
          %220 = sbr.rel (%p218) target = $region32
        $region31: #{sac_policy_forward.1} parent=11 // pred_region
          _
        $region32: #{sac_policy_forward.1} parent=11 // pred_fallthru
          _
        // Predicated region
        $region33: #{sac_policy_forward.1} parent=11 // pred_check
          %p221 = pneg %p165
        $region34: #{sac_policy_forward.1} parent=11 // pred_check_branch
          %223 = sbr.rel (%p221) target = $region36
        $region35: #{sac_policy_forward.1} parent=11 // pred_region
          _
        $region36: #{sac_policy_forward.1} parent=11 // pred_fallthru
          _
      $region12: #{sac_policy_forward.1} parent=5 // pred_fallthru
        _
      %p224 = scmp.lt.s32.totalorder %s13, 2
      // Predicated region
      $region37: #{sac_policy_forward.1} parent=5 // pred_check
        %p225 = pneg %p224
      $region38: #{sac_policy_forward.1} parent=5 // pred_check_branch
        %227 = sbr.rel (%p225) target = $region40
      $region39: #{sac_policy_forward.1} parent=5 // pred_region
        // Predicated region
        $region41: #{sac_policy_forward.1} parent=39 // pred_check
          %p228 = pneg %p33
        $region42: #{sac_policy_forward.1} parent=39 // pred_check_branch
          %230 = sbr.rel (%p228) target = $region44
        $region43: #{sac_policy_forward.1} parent=39 // pred_region
          %s231 = sand.u32 %s23, 1
          %s232 = sand.u32 %s23, 1
          %s233 = smul.addr %s232, 8
          %s234 = scalar_lea.vmem [#allocation2], %s233
          %s235 = smul.addr %s13, 4
          %s236 = scalar_lea.vmem %s0, %s235
          // Predicated region
          $region45: #{sac_policy_forward.1} parent=43 // pred_check
            _
          $region46: #{sac_policy_forward.1} parent=43 // pred_check_branch
            %238 = sbr.rel (0) target = $region48
          $region47: #{sac_policy_forward.1} parent=43 // pred_region
            // Predicated region
            $region49: #{sac_policy_forward.1} parent=47 // pred_check
              _
            $region50: #{sac_policy_forward.1} parent=47 // pred_check_branch
              %240 = sbr.rel target = $region52
            $region51: #{sac_policy_forward.1} parent=47 // pred_region
              // Predicated region
              $region64: #{sac_policy_forward.1} parent=51 // pred_check
                _
              $region65: #{sac_policy_forward.1} parent=51 // pred_check_branch
                %258 = sbr.rel (0) target = $region67
              $region66: #{sac_policy_forward.1} parent=51 // pred_region
                loop: start=0, step=1, limit=1
                $region68: #{sac_policy_forward.1} parent=66 // loop_pre_header
                  _
                $region69: #{sac_policy_forward.1} parent=66 // loop_header
                  %s260 = sphi 0, %s264
                  %p261 = scmp.ge.s32.totalorder %s260, 1
                  %s265 = sphi %s236, %s236
                  %s266 = sphi %s234, %s234
                $region70: #{sac_policy_forward.1} parent=66 // loop_header_branch
                  %263 = sbr.rel (%p261) target = $region74
                $region71: #{sac_policy_forward.1} parent=66 // loop_body
                  _
                $region72: #{sac_policy_forward.1} parent=66 // loop_footer
                  %s264 = sadd.s32 1, %s260
                $region73: #{sac_policy_forward.1} parent=66 // loop_footer_branch
                  %259 = sbr.rel target = $region69
                $region74: #{sac_policy_forward.1} parent=66 // loop_exit
                  _
                %s268 = ssub.s32 16, 1
                loop: start=0, step=1, limit=1
                $region75: #{sac_policy_forward.1} parent=66 // loop_pre_header
                  _
                $region76: #{sac_policy_forward.1} parent=66 // loop_header
                  %s270 = sphi 0, %s274
                  %p271 = scmp.ge.s32.totalorder %s270, 1
                  %s275 = sphi %s236, %s236
                  %s276 = sphi %s234, %s234
                $region77: #{sac_policy_forward.1} parent=66 // loop_header_branch
                  %273 = sbr.rel (%p271) target = $region81
                $region78: #{sac_policy_forward.1} parent=66 // loop_body
                  %v277 = vld [vmem:[%s275] sm:%s268]
                  %278 = vst [vmem:[%s276] sm:%s268] %v277
                  %v279 = vld [vmem:[%s275 + $0x8] sm:%s268]
                  %280 = vst [vmem:[%s276 + $0x4] sm:%s268] %v279
                $region79: #{sac_policy_forward.1} parent=66 // loop_footer
                  %s274 = sadd.s32 1, %s270
                $region80: #{sac_policy_forward.1} parent=66 // loop_footer_branch
                  %269 = sbr.rel target = $region76
                $region81: #{sac_policy_forward.1} parent=66 // loop_exit
                  _
              $region67: #{sac_policy_forward.1} parent=51 // pred_fallthru
                _
            $region52: #{sac_policy_forward.1} parent=47 // pred_fallthru
              _
            // Predicated region
            $region53: #{sac_policy_forward.1} parent=47 // pred_check
              _
            $region54: #{sac_policy_forward.1} parent=47 // pred_check_branch
              %242 = sbr.rel (0) target = $region56
            $region55: #{sac_policy_forward.1} parent=47 // pred_region
              %s244 = ssub.s32 16, 1
              loop: start=0, step=1, limit=1
              $region57: #{sac_policy_forward.1} parent=55 // loop_pre_header
                _
              $region58: #{sac_policy_forward.1} parent=55 // loop_header
                %s246 = sphi 0, %s250
                %p247 = scmp.ge.s32.totalorder %s246, 1
                %s251 = sphi %s236, %s236
                %s252 = sphi %s234, %s234
              $region59: #{sac_policy_forward.1} parent=55 // loop_header_branch
                %249 = sbr.rel (%p247) target = $region63
              $region60: #{sac_policy_forward.1} parent=55 // loop_body
                %v253 = vld [vmem:[%s251] sm:%s244]
                %254 = vst [vmem:[%s252] sm:%s244] %v253
                %v255 = vld [vmem:[%s251 + $0x8] sm:%s244]
                %256 = vst [vmem:[%s252 + $0x4] sm:%s244] %v255
              $region61: #{sac_policy_forward.1} parent=55 // loop_footer
                %s250 = sadd.s32 1, %s246
              $region62: #{sac_policy_forward.1} parent=55 // loop_footer_branch
                %245 = sbr.rel target = $region58
              $region63: #{sac_policy_forward.1} parent=55 // loop_exit
                _
            $region56: #{sac_policy_forward.1} parent=47 // pred_fallthru
              _
          $region48: #{sac_policy_forward.1} parent=43 // pred_fallthru
            _
          %281 = vnop
        $region44: #{sac_policy_forward.1} parent=39 // pred_fallthru
          _
      $region40: #{sac_policy_forward.1} parent=5 // pred_fallthru
        _
      %p282 = scmp.le.s32.totalorder 1, %s13
      %p283 = scmp.lt.s32.totalorder %s13, 3
      %p284 = pnand %p282, %p283
      %p285 = pneg %p284
      // Predicated region
      $region82: #{sac_policy_forward.1} parent=5 // pred_check
        _
      $region83: #{sac_policy_forward.1} parent=5 // pred_check_branch
        %287 = sbr.rel (%p284) target = $region85
      $region84: #{sac_policy_forward.1} parent=5 // pred_region
        %s288 = ssub.s32 %s13, 1
        %s289 = sand.u32 %s26, 1
        %s290 = sand.u32 %s26, 1
        %s291 = smul.addr %s290, 8
        %s292 = scalar_lea.vmem [#allocation2], %s291
        // Predicated region
        $region86: #{sac_policy_forward.1} parent=84 // pred_check
          %p293 = pneg %p39
        $region87: #{sac_policy_forward.1} parent=84 // pred_check_branch
          %295 = sbr.rel (%p293) target = $region89
        $region88: #{sac_policy_forward.1} parent=84 // pred_region
          _
        $region89: #{sac_policy_forward.1} parent=84 // pred_fallthru
          _
        %s296 = sand.u32 %s26, 1
        %s297 = sand.u32 %s26, 1
        %s298 = smul.addr %s297, 8
        %s299 = scalar_lea.vmem [#allocation2], %s298
        %p300 = pneg %p39
        %p301 = pneg %p36
        %p302 = pneg %p60
        %p303 = pneg %p57
        %p304 = pneg %p81
        %p305 = pneg %p78
        %p306 = pneg %p102
        %p307 = pneg %p99
        %p308 = pneg %p123
        %p309 = pneg %p120
        %p310 = pneg %p144
        %p311 = pneg %p141
        %p312 = pneg %p165
        %p313 = pneg %p162
        %p314 = pneg %p191
        %p315 = pneg %p188
        %p316 = scmp.lt.s32.totalorder %s18, 1
        %s317 = scalar_select %p316, %s18, 1
        %s318 = smul.addr %s317, 8
        %s319 = scalar_lea.vmem %s7, %s318
        %p320 = scmp.lt.s32.totalorder %s18, 1
        %s321 = scalar_select %p320, %s18, 1
        %s322 = smul.addr %s321, 8
        %s323 = scalar_lea.vmem %s7, %s322
        %v325 = vld [vmem:[%s1] sm:$0xf]
        %v326 = vld [vmem:[%s1 + $0x4] sm:$0xf]
        %v327 = vld [vmem:[%s1 + $0x8] sm:$0xf]
        %v328 = vld [vmem:[%s1 + $0xc] sm:$0xf]
        %v329 = vld [vmem:[%s1 + $0x10] sm:$0xf]
        %v330 = vld [vmem:[%s1 + $0x14] sm:$0xf]
        %v331 = vld [vmem:[%s1 + $0x18] sm:$0xf]
        %v332 = vld [vmem:[%s1 + $0x1c] sm:$0xf]
        %v333 = vld [vmem:[%s1 + $0x20] sm:$0xf]
        %v334 = vld [vmem:[%s1 + $0x24] sm:$0xf]
        %v335 = vld [vmem:[%s1 + $0x28] sm:$0xf]
        %v336 = vld [vmem:[%s1 + $0x2c] sm:$0xf]
        %v337 = vld [vmem:[%s1 + $0x30] sm:$0xf]
        %v338 = vld [vmem:[%s1 + $0x34] sm:$0xf]
        %v339 = vld [vmem:[%s1 + $0x38] sm:$0xf]
        %v340 = vld [vmem:[%s1 + $0x3c] sm:$0xf]
        %v341 = vld [vmem:[%s292] sm:$0xf]
        %v342 = vld [vmem:[%s292 + $0x4] sm:$0xf]
        %v343 = vld [vmem:[%s4] sm:$0xff]
        %v344 = vld [vmem:[%s4 + $0x8] sm:$0xff]
        %v345 = vld [vmem:[%s4 + $0x10] sm:$0xff]
        %v346 = vld [vmem:[%s4 + $0x18] sm:$0xff]
        %v347 = vld [vmem:[%s4 + $0x20] sm:$0xff]
        %v348 = vld [vmem:[%s4 + $0x28] sm:$0xff]
        %v349 = vld [vmem:[%s4 + $0x30] sm:$0xff]
        %v350 = vld [vmem:[%s4 + $0x38] sm:$0xff]
        %v351 = vld [vmem:[%s4 + $0x40] sm:$0xff]
        %v352 = vld [vmem:[%s4 + $0x48] sm:$0xff]
        %v353 = vld [vmem:[%s4 + $0x50] sm:$0xff]
        %v354 = vld [vmem:[%s4 + $0x58] sm:$0xff]
        %v355 = vld [vmem:[%s4 + $0x60] sm:$0xff]
        %v356 = vld [vmem:[%s4 + $0x68] sm:$0xff]
        %v357 = vld [vmem:[%s4 + $0x70] sm:$0xff]
        %v358 = vld [vmem:[%s4 + $0x78] sm:$0xff]
        %360 = vset.pattern.permute.xlu0 0
        %361 = vperm.xlu0 %360, %v343
        %v362 = vpop.permute.xlu0 %361
        %365 = vset.pattern.permute.xlu0 0
        %366 = vperm.xlu0 %365, %v344
        %v367 = vpop.permute.xlu0 %366
        %370 = vset.pattern.permute.xlu0 0
        %371 = vperm.xlu0 %370, %v345
        %v372 = vpop.permute.xlu0 %371
        %375 = vset.pattern.permute.xlu0 0
        %376 = vperm.xlu0 %375, %v346
        %v377 = vpop.permute.xlu0 %376
        %380 = vset.pattern.permute.xlu0 0
        %381 = vperm.xlu0 %380, %v347
        %v382 = vpop.permute.xlu0 %381
        %385 = vset.pattern.permute.xlu0 0
        %386 = vperm.xlu0 %385, %v348
        %v387 = vpop.permute.xlu0 %386
        %390 = vset.pattern.permute.xlu0 0
        %391 = vperm.xlu0 %390, %v349
        %v392 = vpop.permute.xlu0 %391
        %395 = vset.pattern.permute.xlu0 0
        %396 = vperm.xlu0 %395, %v350
        %v397 = vpop.permute.xlu0 %396
        %400 = vset.pattern.permute.xlu0 0
        %401 = vperm.xlu0 %400, %v351
        %v402 = vpop.permute.xlu0 %401
        %405 = vset.pattern.permute.xlu0 0
        %406 = vperm.xlu0 %405, %v352
        %v407 = vpop.permute.xlu0 %406
        %410 = vset.pattern.permute.xlu0 0
        %411 = vperm.xlu0 %410, %v353
        %v412 = vpop.permute.xlu0 %411
        %415 = vset.pattern.permute.xlu0 0
        %416 = vperm.xlu0 %415, %v354
        %v417 = vpop.permute.xlu0 %416
        %420 = vset.pattern.permute.xlu0 0
        %421 = vperm.xlu0 %420, %v355
        %v422 = vpop.permute.xlu0 %421
        %425 = vset.pattern.permute.xlu0 0
        %426 = vperm.xlu0 %425, %v356
        %v427 = vpop.permute.xlu0 %426
        %430 = vset.pattern.permute.xlu0 0
        %431 = vperm.xlu0 %430, %v357
        %v432 = vpop.permute.xlu0 %431
        %435 = vset.pattern.permute.xlu0 0
        %436 = vperm.xlu0 %435, %v358
        %v437 = vpop.permute.xlu0 %436
        %v455 = vunpack.c.l.b16 %v325
        %v456 = vunpack.c.l.b16 %v326
        %v457 = vunpack.c.l.b16 %v327
        %v458 = vunpack.c.l.b16 %v328
        %v459 = vunpack.c.l.b16 %v329
        %v460 = vunpack.c.l.b16 %v330
        %v461 = vunpack.c.l.b16 %v331
        %v462 = vunpack.c.l.b16 %v332
        %v463 = vunpack.c.l.b16 %v333
        %v464 = vunpack.c.l.b16 %v334
        %v465 = vunpack.c.l.b16 %v335
        %v466 = vunpack.c.l.b16 %v336
        %v467 = vunpack.c.l.b16 %v337
        %v468 = vunpack.c.l.b16 %v338
        %v469 = vunpack.c.l.b16 %v339
        %v470 = vunpack.c.l.b16 %v340
        %v471 = vpack.c.b16 %v456, %v455
        %v472 = vpack.c.b16 %v458, %v457
        %v473 = vpack.c.b16 %v460, %v459
        %v474 = vpack.c.b16 %v462, %v461
        %v475 = vpack.c.b16 %v464, %v463
        %v476 = vpack.c.b16 %v466, %v465
        %v477 = vpack.c.b16 %v468, %v467
        %v478 = vpack.c.b16 %v470, %v469
        %v481 = vunpack.c.l.b16 %v341
        %v482 = vunpack.c.l.b16 %v342
        %v483 = vpack.c.b16 %v482, %v481
        %vm485 = vcmask 130048
        %v487 = vsel %vm485, %v471, 0
        %v490 = vsel %vm485, %v472, 0
        %v493 = vsel %vm485, %v473, 0
        %v496 = vsel %vm485, %v474, 0
        %v499 = vsel %vm485, %v475, 0
        %v502 = vsel %vm485, %v476, 0
        %v505 = vsel %vm485, %v477, 0
        %v508 = vsel %vm485, %v478, 0
        %510 = vmatprep.subr.bf16.mxu0 0
        %511 = vmatpush1.bf16.msra.mxu0 0
        %512 = vmatprep.subr.bf16.mxu0 0
        %513 = vmatpush1.bf16.msra.mxu0 0
        %514 = vmatprep.subr.bf16.mxu0 0
        %515 = vmatpush1.bf16.msra.mxu0 0
        %516 = vmatprep.subr.bf16.mxu0 0
        %517 = vmatpush1.bf16.msra.mxu0 0
        %518 = vmatprep.subr.bf16.mxu0 0
        %519 = vmatpush1.bf16.msra.mxu0 0
        %520 = vmatprep.subr.bf16.mxu0 0
        %521 = vmatpush1.bf16.msra.mxu0 0
        %522 = vmatprep.subr.bf16.mxu0 0
        %523 = vmatpush1.bf16.msra.mxu0 0
        %524 = vmatprep.subr.bf16.mxu0 0
        %525 = vmatpush1.bf16.msra.mxu0 %v483
        %526 = vmatprep.subr.bf16.mxu0 0
        %527 = vmatpush2.bf16.msra.mxu0 0
        %528 = vmatprep.subr.bf16.mxu0 0
        %529 = vmatpush2.bf16.msra.mxu0 0
        %530 = vmatprep.subr.bf16.mxu0 0
        %531 = vmatpush2.bf16.msra.mxu0 0
        %532 = vmatprep.subr.bf16.mxu0 0
        %533 = vmatpush2.bf16.msra.mxu0 0
        %534 = vmatprep.subr.bf16.mxu0 0
        %535 = vmatpush2.bf16.msra.mxu0 0
        %536 = vmatprep.subr.bf16.mxu0 0
        %537 = vmatpush2.bf16.msra.mxu0 0
        %538 = vmatprep.subr.bf16.mxu0 0
        %539 = vmatpush2.bf16.msra.mxu0 0
        %540 = vmatprep.subr.bf16.mxu0 0
        %541 = vmatpush2.bf16.msra.mxu0 0
        %542 = vmatprep.mubr.bf16.mxu0 0
        %543 = vmatmul.mubr.bf16.gmra.mxu0 %v487
        %v544 = vpop.f32.mrf.mxu0
        %v545 = vadd.f32 %v362, %v544
        %v546 = vpop.f32.mrf.mxu0
        %v547 = vpop.f32.mrf.mxu0
        %v548 = vadd.f32 %v367, %v547
        %v549 = vpop.f32.mrf.mxu0
        %550 = vmatprep.mubr.bf16.mxu0 0
        %551 = vmatmul.mubr.bf16.gmra.mxu0 %v490
        %v552 = vpop.f32.mrf.mxu0
        %v553 = vadd.f32 %v372, %v552
        %v554 = vpop.f32.mrf.mxu0
        %v555 = vpop.f32.mrf.mxu0
        %v556 = vadd.f32 %v377, %v555
        %v557 = vpop.f32.mrf.mxu0
        %558 = vmatprep.mubr.bf16.mxu0 0
        %559 = vmatmul.mubr.bf16.gmra.mxu0 %v493
        %v560 = vpop.f32.mrf.mxu0
        %v561 = vadd.f32 %v382, %v560
        %v562 = vpop.f32.mrf.mxu0
        %v563 = vpop.f32.mrf.mxu0
        %v564 = vadd.f32 %v387, %v563
        %v565 = vpop.f32.mrf.mxu0
        %566 = vmatprep.mubr.bf16.mxu0 0
        %567 = vmatmul.mubr.bf16.gmra.mxu0 %v496
        %v568 = vpop.f32.mrf.mxu0
        %v569 = vadd.f32 %v392, %v568
        %v570 = vpop.f32.mrf.mxu0
        %v571 = vpop.f32.mrf.mxu0
        %v572 = vadd.f32 %v397, %v571
        %v573 = vpop.f32.mrf.mxu0
        %574 = vmatprep.mubr.bf16.mxu0 0
        %575 = vmatmul.mubr.bf16.gmra.mxu0 %v499
        %v576 = vpop.f32.mrf.mxu0
        %v577 = vadd.f32 %v402, %v576
        %v578 = vpop.f32.mrf.mxu0
        %v579 = vpop.f32.mrf.mxu0
        %v580 = vadd.f32 %v407, %v579
        %v581 = vpop.f32.mrf.mxu0
        %582 = vmatprep.mubr.bf16.mxu0 0
        %583 = vmatmul.mubr.bf16.gmra.mxu0 %v502
        %v584 = vpop.f32.mrf.mxu0
        %v585 = vadd.f32 %v412, %v584
        %v586 = vpop.f32.mrf.mxu0
        %v587 = vpop.f32.mrf.mxu0
        %v588 = vadd.f32 %v417, %v587
        %v589 = vpop.f32.mrf.mxu0
        %590 = vmatprep.mubr.bf16.mxu0 0
        %591 = vmatmul.mubr.bf16.gmra.mxu0 %v505
        %v592 = vpop.f32.mrf.mxu0
        %v593 = vadd.f32 %v422, %v592
        %v594 = vpop.f32.mrf.mxu0
        %v595 = vpop.f32.mrf.mxu0
        %v596 = vadd.f32 %v427, %v595
        %v597 = vpop.f32.mrf.mxu0
        %598 = vmatprep.mubr.bf16.mxu0 0
        %599 = vmatmul.mubr.bf16.gmra.mxu0 %v508
        %v600 = vpop.f32.mrf.mxu0
        %v601 = vadd.f32 %v432, %v600
        %v602 = vpop.f32.mrf.mxu0
        %v603 = vpop.f32.mrf.mxu0
        %v604 = vadd.f32 %v437, %v603
        %v605 = vpop.f32.mrf.mxu0
        %606 = vdwg.mxu0
        %v607 = vmax.f32 %v545, 0.0
        %v608 = vmax.f32 %v548, 0.0
        %v609 = vmax.f32 %v553, 0.0
        %v610 = vmax.f32 %v556, 0.0
        %v611 = vmax.f32 %v561, 0.0
        %v612 = vmax.f32 %v564, 0.0
        %v613 = vmax.f32 %v569, 0.0
        %v614 = vmax.f32 %v572, 0.0
        %v615 = vmax.f32 %v577, 0.0
        %v616 = vmax.f32 %v580, 0.0
        %v617 = vmax.f32 %v585, 0.0
        %v618 = vmax.f32 %v588, 0.0
        %v619 = vmax.f32 %v593, 0.0
        %v620 = vmax.f32 %v596, 0.0
        %v621 = vmax.f32 %v601, 0.0
        %v622 = vmax.f32 %v604, 0.0
        %v623 = vld [vmem:[%s2] sm:$0xf]
        %v624 = vld [vmem:[%s2 + $0x4] sm:$0xf]
        %v625 = vld [vmem:[%s2 + $0x8] sm:$0xf]
        %v626 = vld [vmem:[%s2 + $0xc] sm:$0xf]
        %v627 = vld [vmem:[%s2 + $0x10] sm:$0xf]
        %v628 = vld [vmem:[%s2 + $0x14] sm:$0xf]
        %v629 = vld [vmem:[%s2 + $0x18] sm:$0xf]
        %v630 = vld [vmem:[%s2 + $0x1c] sm:$0xf]
        %v631 = vpack.c.bf16 %v608, %v607
        %v632 = vpack.c.bf16 %v610, %v609
        %v633 = vpack.c.bf16 %v612, %v611
        %v634 = vpack.c.bf16 %v614, %v613
        %v635 = vpack.c.bf16 %v616, %v615
        %v636 = vpack.c.bf16 %v618, %v617
        %v637 = vpack.c.bf16 %v620, %v619
        %v638 = vpack.c.bf16 %v622, %v621
        %v639 = vld [vmem:[%s5] sm:$0xff]
        %v640 = vld [vmem:[%s5 + $0x8] sm:$0xff]
        %v641 = vld [vmem:[%s5 + $0x10] sm:$0xff]
        %v642 = vld [vmem:[%s5 + $0x18] sm:$0xff]
        %v643 = vld [vmem:[%s5 + $0x20] sm:$0xff]
        %v644 = vld [vmem:[%s5 + $0x28] sm:$0xff]
        %v645 = vld [vmem:[%s5 + $0x30] sm:$0xff]
        %v646 = vld [vmem:[%s5 + $0x38] sm:$0xff]
        %648 = vset.pattern.permute.xlu0 0
        %649 = vperm.xlu0 %648, %v639
        %v650 = vpop.permute.xlu0 %649
        %653 = vset.pattern.permute.xlu0 0
        %654 = vperm.xlu0 %653, %v640
        %v655 = vpop.permute.xlu0 %654
        %658 = vset.pattern.permute.xlu0 0
        %659 = vperm.xlu0 %658, %v641
        %v660 = vpop.permute.xlu0 %659
        %663 = vset.pattern.permute.xlu0 0
        %664 = vperm.xlu0 %663, %v642
        %v665 = vpop.permute.xlu0 %664
        %668 = vset.pattern.permute.xlu0 0
        %669 = vperm.xlu0 %668, %v643
        %v670 = vpop.permute.xlu0 %669
        %673 = vset.pattern.permute.xlu0 0
        %674 = vperm.xlu0 %673, %v644
        %v675 = vpop.permute.xlu0 %674
        %678 = vset.pattern.permute.xlu0 0
        %679 = vperm.xlu0 %678, %v645
        %v680 = vpop.permute.xlu0 %679
        %683 = vset.pattern.permute.xlu0 0
        %684 = vperm.xlu0 %683, %v646
        %v685 = vpop.permute.xlu0 %684
        %v695 = vunpack.c.l.b16 %v623
        %v696 = vunpack.c.l.b16 %v624
        %v697 = vunpack.c.l.b16 %v625
        %v698 = vunpack.c.l.b16 %v626
        %v699 = vunpack.c.l.b16 %v627
        %v700 = vunpack.c.l.b16 %v628
        %v701 = vunpack.c.l.b16 %v629
        %v702 = vunpack.c.l.b16 %v630
        %v703 = vpack.c.b16 %v696, %v695
        %v704 = vpack.c.b16 %v698, %v697
        %v705 = vpack.c.b16 %v700, %v699
        %v706 = vpack.c.b16 %v702, %v701
        %711 = vmatprep.subr.bf16.mxu0 0
        %712 = vmatpush1.bf16.msra.mxu0 %v638
        %713 = vmatprep.subr.bf16.mxu0 0
        %714 = vmatpush1.bf16.msra.mxu0 %v637
        %715 = vmatprep.subr.bf16.mxu0 0
        %716 = vmatpush1.bf16.msra.mxu0 %v636
        %717 = vmatprep.subr.bf16.mxu0 0
        %718 = vmatpush1.bf16.msra.mxu0 %v635
        %719 = vmatprep.subr.bf16.mxu0 0
        %720 = vmatpush1.bf16.msra.mxu0 %v634
        %721 = vmatprep.subr.bf16.mxu0 0
        %722 = vmatpush1.bf16.msra.mxu0 %v633
        %723 = vmatprep.subr.bf16.mxu0 0
        %724 = vmatpush1.bf16.msra.mxu0 %v632
        %725 = vmatprep.subr.bf16.mxu0 0
        %726 = vmatpush1.bf16.msra.mxu0 %v631
        %727 = vmatprep.subr.bf16.mxu0 0
        %728 = vmatpush2.bf16.msra.mxu0 0
        %729 = vmatprep.subr.bf16.mxu0 0
        %730 = vmatpush2.bf16.msra.mxu0 0
        %731 = vmatprep.subr.bf16.mxu0 0
        %732 = vmatpush2.bf16.msra.mxu0 0
        %733 = vmatprep.subr.bf16.mxu0 0
        %734 = vmatpush2.bf16.msra.mxu0 0
        %735 = vmatprep.subr.bf16.mxu0 0
        %736 = vmatpush2.bf16.msra.mxu0 0
        %737 = vmatprep.subr.bf16.mxu0 0
        %738 = vmatpush2.bf16.msra.mxu0 0
        %739 = vmatprep.subr.bf16.mxu0 0
        %740 = vmatpush2.bf16.msra.mxu0 0
        %741 = vmatprep.subr.bf16.mxu0 0
        %742 = vmatpush2.bf16.msra.mxu0 0
        %743 = vmatprep.mubr.bf16.mxu0 0
        %744 = vmatmul.mubr.bf16.gmra.mxu0 %v703
        %v745 = vpop.f32.mrf.mxu0
        %v746 = vadd.f32 %v650, %v745
        %v747 = vpop.f32.mrf.mxu0
        %v748 = vpop.f32.mrf.mxu0
        %v749 = vadd.f32 %v655, %v748
        %v750 = vpop.f32.mrf.mxu0
        %751 = vmatprep.mubr.bf16.mxu0 0
        %752 = vmatmul.mubr.bf16.gmra.mxu0 %v704
        %v753 = vpop.f32.mrf.mxu0
        %v754 = vadd.f32 %v660, %v753
        %v755 = vpop.f32.mrf.mxu0
        %v756 = vpop.f32.mrf.mxu0
        %v757 = vadd.f32 %v665, %v756
        %v758 = vpop.f32.mrf.mxu0
        %759 = vmatprep.mubr.bf16.mxu0 0
        %760 = vmatmul.mubr.bf16.gmra.mxu0 %v705
        %v761 = vpop.f32.mrf.mxu0
        %v762 = vadd.f32 %v670, %v761
        %v763 = vpop.f32.mrf.mxu0
        %v764 = vpop.f32.mrf.mxu0
        %v765 = vadd.f32 %v675, %v764
        %v766 = vpop.f32.mrf.mxu0
        %767 = vmatprep.mubr.bf16.mxu0 0
        %768 = vmatmul.mubr.bf16.gmra.mxu0 %v706
        %v769 = vpop.f32.mrf.mxu0
        %v770 = vadd.f32 %v680, %v769
        %v771 = vpop.f32.mrf.mxu0
        %v772 = vpop.f32.mrf.mxu0
        %v773 = vadd.f32 %v685, %v772
        %v774 = vpop.f32.mrf.mxu0
        %775 = vdwg.mxu0
        %v776 = vmax.f32 %v746, 0.0
        %v777 = vmax.f32 %v749, 0.0
        %v778 = vmax.f32 %v754, 0.0
        %v779 = vmax.f32 %v757, 0.0
        %v780 = vmax.f32 %v762, 0.0
        %v781 = vmax.f32 %v765, 0.0
        %v782 = vmax.f32 %v770, 0.0
        %v783 = vmax.f32 %v773, 0.0
        %v784 = vld [vmem:[%s3] sm:$0xf]
        %v785 = vpack.c.bf16 %v777, %v776
        %v786 = vpack.c.bf16 %v779, %v778
        %v787 = vpack.c.bf16 %v781, %v780
        %v788 = vpack.c.bf16 %v783, %v782
        %v789 = vld [vmem:[%s6] sm:$0xff]
        %791 = vset.pattern.permute.xlu0 0
        %792 = vperm.xlu0 %791, %v789
        %v793 = vpop.permute.xlu0 %792
        %vm795 = vcmask 523264
        %v797 = vsel %vm795, %v784, 0
        %799 = vmatprep.subr.bf16.mxu0 0
        %800 = vmatpush1.bf16.msra.mxu0 0
        %801 = vmatprep.subr.bf16.mxu0 0
        %802 = vmatpush1.bf16.msra.mxu0 0
        %803 = vmatprep.subr.bf16.mxu0 0
        %804 = vmatpush1.bf16.msra.mxu0 0
        %805 = vmatprep.subr.bf16.mxu0 0
        %806 = vmatpush1.bf16.msra.mxu0 0
        %807 = vmatprep.subr.bf16.mxu0 0
        %808 = vmatpush1.bf16.msra.mxu0 %v788
        %809 = vmatprep.subr.bf16.mxu0 0
        %810 = vmatpush1.bf16.msra.mxu0 %v787
        %811 = vmatprep.subr.bf16.mxu0 0
        %812 = vmatpush1.bf16.msra.mxu0 %v786
        %813 = vmatprep.subr.bf16.mxu0 0
        %814 = vmatpush1.bf16.msra.mxu0 %v785
        %815 = vmatprep.subr.bf16.mxu0 0
        %816 = vmatpush2.bf16.msra.mxu0 0
        %817 = vmatprep.subr.bf16.mxu0 0
        %818 = vmatpush2.bf16.msra.mxu0 0
        %819 = vmatprep.subr.bf16.mxu0 0
        %820 = vmatpush2.bf16.msra.mxu0 0
        %821 = vmatprep.subr.bf16.mxu0 0
        %822 = vmatpush2.bf16.msra.mxu0 0
        %823 = vmatprep.subr.bf16.mxu0 0
        %824 = vmatpush2.bf16.msra.mxu0 0
        %825 = vmatprep.subr.bf16.mxu0 0
        %826 = vmatpush2.bf16.msra.mxu0 0
        %827 = vmatprep.subr.bf16.mxu0 0
        %828 = vmatpush2.bf16.msra.mxu0 0
        %829 = vmatprep.subr.bf16.mxu0 0
        %830 = vmatpush2.bf16.msra.mxu0 0
        %831 = vmatprep.mubr.bf16.mxu0 0
        %832 = vmatmul.mubr.bf16.gmra.mxu0 %v797
        %v833 = vpop.f32.mrf.mxu0
        %v834 = vadd.f32 %v793, %v833
        %v835 = vpop.f32.mrf.mxu0
        %v836 = vpop.f32.mrf.mxu0
        %v837 = vpop.f32.mrf.mxu0
        %838 = vdwg.mxu0
        %v839 = vlaneseq
        %v840 = vshrl.u32 %v839, 7
        %vm841 = vcmp.lt.s32.totalorder %v840, 4
        %v842 = vtanh.pop %v834
        %v843 = vmax.f32 %v834, -20.0
        %v844 = vmin.f32 %v843, 2.0
        %v845 = vsel %vm841, %v842, %v844
        %846 = vst [vmem:[%s323] sm:$0xff] %v845
        %p847 = scmp.lt.s32.totalorder %s18, 1
        %s848 = scalar_select %p847, %s18, 1
        %s849 = smul.addr %s848, 8
        %s850 = scalar_lea.vmem %s7, %s849
        // Predicated region
        $region90: #{sac_policy_forward.1} parent=84 // pred_check
          %p851 = pneg %p188
        $region91: #{sac_policy_forward.1} parent=84 // pred_check_branch
          %853 = sbr.rel (%p851) target = $region93
        $region92: #{sac_policy_forward.1} parent=84 // pred_region
          _
        $region93: #{sac_policy_forward.1} parent=84 // pred_fallthru
          _
      $region85: #{sac_policy_forward.1} parent=5 // pred_fallthru
        _
      %p854 = scmp.le.s32.totalorder 2, %s13
      // Predicated region
      $region94: #{sac_policy_forward.1} parent=5 // pred_check
        %p855 = pneg %p854
      $region95: #{sac_policy_forward.1} parent=5 // pred_check_branch
        %857 = sbr.rel (%p855) target = $region97
      $region96: #{sac_policy_forward.1} parent=5 // pred_region
        %s858 = ssub.s32 %s13, 2
        // Predicated region
        $region98: #{sac_policy_forward.1} parent=96 // pred_check
          %p859 = pneg %p194
        $region99: #{sac_policy_forward.1} parent=96 // pred_check_branch
          %861 = sbr.rel (%p859) target = $region101
        $region100: #{sac_policy_forward.1} parent=96 // pred_region
          %p862 = scmp.lt.s32.totalorder %s19, 1
          %s863 = scalar_select %p862, %s19, 1
          %s864 = smul.addr %s863, 8
          %s865 = scalar_lea.vmem %s7, %s864
        $region101: #{sac_policy_forward.1} parent=96 // pred_fallthru
          _
      $region97: #{sac_policy_forward.1} parent=5 // pred_fallthru
        _
    $region6: #{sac_policy_forward.1} parent=1 // loop_footer
      %s17 = sadd.s32 1, %s13
    $region7: #{sac_policy_forward.1} parent=1 // loop_footer_branch
      %12 = sbr.rel target = $region3
    $region8: #{sac_policy_forward.1} parent=1 // loop_exit
      _

</llo_original>
